<compile_context>
chip_gen: v7x
topology: tpu7x:2x2x1
jax: 0.10.0
libtpu: 0.0.40
codegen_flags: <defaults>
</compile_context>

<pallas_src>
import functools

import numpy as np
import jax
import jax.numpy as jnp
from jax.experimental import pallas as pl
from jax.experimental.pallas import tpu as pltpu


def _round_up(x, m):
    return ((x + m - 1) // m) * m


def _pick_vmem_limit():
    """Generation-dependent VMEM cap: v7x has 64 MiB physical, v5e/v6e 128 MiB."""
    try:
        kind = jax.devices()[0].device_kind.lower()
    except Exception:
        return 32 * 1024 * 1024
    if "v7" in kind:
        return 48 * 1024 * 1024
    if any(g in kind for g in ("v6", "v5", "v4")):
        return 96 * 1024 * 1024
    return 32 * 1024 * 1024


VMEM_LIMIT = _pick_vmem_limit()


def _pick_tile(n, cap, align):
    """Largest tile <= cap (multiple of `align`) that divides the padded extent.

    Prefers a single full-extent tile (no padding) when n fits under cap; for
    larger n it searches for a divisor of the aligned extent so host-side
    padding of big activations is avoided whenever n is already aligned.
    Returns (tile, padded_extent)."""
    n_al = _round_up(n, align)
    if n_al <= cap:
        return n_al, n_al
    for t in range(cap, 0, -align):
        if n_al % t == 0:
            return t, n_al
    return cap, _round_up(n_al, cap)


# ----------------------------------------------------------------------------
# Tiled fused matmul (+ folded BN + ReLU epilogue)
# ----------------------------------------------------------------------------

def _matmul_kernel_k1(a_ref, b_ref, scale_ref, bias_ref, o_ref, *, relu):
    # Single K step: no f32 accumulator round-trip, no pl.when predication.
    out = jnp.dot(a_ref[...], b_ref[...], preferred_element_type=jnp.float32)
    out = out * scale_ref[...] + bias_ref[...]
    if relu:
        out = jnp.maximum(out, 0.0)
    o_ref[...] = out.astype(o_ref.dtype)


def _matmul_kernel(a_ref, b_ref, scale_ref, bias_ref, o_ref, acc_ref, *, relu):
    k = pl.program_id(2)

    @pl.when(k == 0)
    def _():
        acc_ref[...] = jnp.zeros_like(acc_ref)

    acc_ref[...] += jnp.dot(a_ref[...], b_ref[...],
                            preferred_element_type=jnp.float32)

    @pl.when(k == pl.num_programs(2) - 1)
    def _():
        out = acc_ref[...] * scale_ref[...] + bias_ref[...]
        if relu:
            out = jnp.maximum(out, 0.0)
        o_ref[...] = out.astype(o_ref.dtype)


def fused_matmul(a, b, scale=None, bias=None, relu=False,
                 out_dtype=jnp.bfloat16):
    """maybe_relu(scale * (a @ b) + bias), tiled on the MXU with bf16 operands."""
    m, k = a.shape
    k2, n = b.shape
    assert k == k2, (a.shape, b.shape)
    if scale is None:
        scale = jnp.ones((m,), jnp.float32)
    if bias is None:
        bias = jnp.zeros((m,), jnp.float32)

    tm, mp = _pick_tile(m, 256, 8)        # tm = full Cout for every layer here
    tn, np_ = _pick_tile(n, 2048, 128)    # big N tiles: fewer grid steps
    k_al = _round_up(k, 8)
    if k_al <= 1024:                      # single K step; avoid padding K to 128
        tk, kp = k_al, k_al
    else:
        tk, kp = _pick_tile(k, 1024, 128)

    a_bf = a if a.dtype == jnp.bfloat16 else a.astype(jnp.bfloat16)
    b_bf = b if b.dtype == jnp.bfloat16 else b.astype(jnp.bfloat16)
    if (mp, kp) != (m, k):
        a_bf = jnp.pad(a_bf, ((0, mp - m), (0, kp - k)))
    if (kp, np_) != (k, n):
        b_bf = jnp.pad(b_bf, ((0, kp - k), (0, np_ - n)))
    s_p = scale.astype(jnp.float32).reshape(m, 1)
    z_p = bias.astype(jnp.float32).reshape(m, 1)
    if mp != m:
        s_p = jnp.pad(s_p, ((0, mp - m), (0, 0)))
        z_p = jnp.pad(z_p, ((0, mp - m), (0, 0)))

    mg, ng, kg = mp // tm, np_ // tn, kp // tk
    cost = pl.CostEstimate(flops=2 * mp * np_ * kp, transcendentals=0,
                           bytes_accessed=2 * (mp * kp + kp * np_ + mp * np_))

    if kg == 1:
        out = pl.pallas_call(
            functools.partial(_matmul_kernel_k1, relu=relu),
            out_shape=jax.ShapeDtypeStruct((mp, np_), out_dtype),
            grid=(ng, mg),                      # N leading: v7x TC sharding
            in_specs=[
                pl.BlockSpec((tm, kp), lambda j, i: (i, 0)),
                pl.BlockSpec((kp, tn), lambda j, i: (0, j)),
                pl.BlockSpec((tm, 1), lambda j, i: (i, 0)),
                pl.BlockSpec((tm, 1), lambda j, i: (i, 0)),
            ],
            out_specs=pl.BlockSpec((tm, tn), lambda j, i: (i, j)),
            compiler_params=pltpu.CompilerParams(
                dimension_semantics=("parallel", "parallel"),
                vmem_limit_bytes=VMEM_LIMIT),
            cost_estimate=cost,
        )(a_bf, b_bf, s_p, z_p)
    else:
        out = pl.pallas_call(
            functools.partial(_matmul_kernel, relu=relu),
            out_shape=jax.ShapeDtypeStruct((mp, np_), out_dtype),
            grid=(ng, mg, kg),
            in_specs=[
                pl.BlockSpec((tm, tk), lambda j, i, kk: (i, kk)),
                pl.BlockSpec((tk, tn), lambda j, i, kk: (kk, j)),
                pl.BlockSpec((tm, 1), lambda j, i, kk: (i, 0)),
                pl.BlockSpec((tm, 1), lambda j, i, kk: (i, 0)),
            ],
            out_specs=pl.BlockSpec((tm, tn), lambda j, i, kk: (i, j)),
            scratch_shapes=[pltpu.VMEM((tm, tn), jnp.float32)],
            compiler_params=pltpu.CompilerParams(
                dimension_semantics=("parallel", "parallel", "arbitrary"),
                vmem_limit_bytes=VMEM_LIMIT),
            cost_estimate=cost,
        )(a_bf, b_bf, s_p, z_p)

    if (mp, np_) != (m, n):
        out = out[:m, :n]
    return out


# ----------------------------------------------------------------------------
# Direct (no-im2col) stride-1 KhxKw conv: lane-aligned shift-and-accumulate
# ----------------------------------------------------------------------------

def _direct_conv_kernel(x_ref, w_ref, scale_ref, bias_ref, o_ref, acc_ref,
                        *, kh, kw, d, wpad, relu):
    ci = pl.program_id(1)

    @pl.when(ci == 0)
    def _():
        acc_ref[...] = jnp.zeros_like(acc_ref)

    mo = acc_ref.shape[1]
    span = (kh - 1) * d * wpad + mo
    # Group the kh*kw taps by column offset: only kw lane-shifted slab loads;
    # the per-row shifts i*d*wpad are lane-aligned (wpad % 128 == 0) and are
    # applied as cheap aligned value slices.  Each tap accumulates directly
    # into the f32 VMEM accumulator (no multi-MB live partial sum -> no spills).
    for j in range(kw):
        xj = x_ref[:, j * d:j * d + span]
        for i in range(kh):
            acc_ref[...] += jnp.dot(
                w_ref[i * kw + j],
                xj[:, i * d * wpad:i * d * wpad + mo],
                preferred_element_type=jnp.float32)

    @pl.when(ci == pl.num_programs(1) - 1)
    def _():
        out = acc_ref[...] * scale_ref[...] + bias_ref[...]
        if relu:
            out = jnp.maximum(out, 0.0)
        o_ref[...] = out.astype(o_ref.dtype)


def conv_direct(x, w, scale, bias, *, padding, dilation, relu,
                out_dtype=jnp.bfloat16):
    """Stride-1 conv in channel-major (Cin, B, H, W) layout.

    The kh*kw taps are shifted slices of a flattened padded plane whose width
    is rounded to a multiple of 128 so row offsets stay lane-aligned; the 9x
    im2col blow-up never touches HBM.  Returns (Cout, B, Ho, Wo).
    """
    Cin, B, H, W = x.shape
    Cout, _, kh, kw = w.shape
    d, p = dilation, padding
    Ho = H + 2 * p - d * (kh - 1)
    Wo = W + 2 * p - d * (kw - 1)
    Hp, Wp = H + 2 * p, W + 2 * p
    Wpad = _round_up(Wp, 128)                 # lane-aligned row stride
    mo = Ho * Wpad                            # output slab per batch (x128)
    extra = _round_up((kw - 1) * d, 128)      # headroom for the column shifts
    lp = Hp * Wpad + extra                    # flattened plane length per batch
    # TODO(synk): the Wpad-Wo garbage columns trade ~(Wpad/Wp-1) extra MXU work
    # for lane-aligned loads; compacting to Wo inside the kernel would need a
    # per-row (2D) formulation.

    ci_t = min(256, _round_up(Cin, 8))
    cin_p = _round_up(Cin, ci_t)
    n_ci = cin_p // ci_t
    # TODO(synk): at production resolutions also tile the output rows (halo'd
    # blocks via manual DMA) so the per-batch plane block stays within v7x's
    # 64 MiB VMEM and the two TCs can split the spatial axis instead of B.

    x_bf = x if x.dtype == jnp.bfloat16 else x.astype(jnp.bfloat16)
    xp = jnp.pad(x_bf, ((0, cin_p - Cin), (0, 0), (p, p), (p, Wpad - W - p)))
    xf = xp.reshape(cin_p, B, Hp * Wpad)
    if extra:
        xf = jnp.pad(xf, ((0, 0), (0, 0), (0, extra)))
    xf = xf.reshape(cin_p, B * lp)

    wt = jnp.transpose(w, (2, 3, 0, 1)).reshape(kh * kw, Cout, Cin)
    wt = jnp.pad(wt.astype(jnp.bfloat16), ((0, 0), (0, 0), (0, cin_p - Cin)))

    s2 = scale.astype(jnp.float32).reshape(Cout, 1)
    z2 = bias.astype(jnp.float32).reshape(Cout, 1)

    out = pl.pallas_call(
        functools.partial(_direct_conv_kernel, kh=kh, kw=kw, d=d, wpad=Wpad,
                          relu=relu),
        out_shape=jax.ShapeDtypeStruct((Cout, B * mo), out_dtype),
        grid=(B, n_ci),
        in_specs=[
            pl.BlockSpec((ci_t, lp), lambda b, c: (c, b)),
            pl.BlockSpec((kh * kw, Cout, ci_t), lambda b, c: (0, 0, c)),
            pl.BlockSpec((Cout, 1), lambda b, c: (0, 0)),
            pl.BlockSpec((Cout, 1), lambda b, c: (0, 0)),
        ],
        out_specs=pl.BlockSpec((Cout, mo), lambda b, c: (0, b)),
        scratch_shapes=[pltpu.VMEM((Cout, mo), jnp.float32)],
        compiler_params=pltpu.CompilerParams(
            dimension_semantics=("parallel", "arbitrary"),
            vmem_limit_bytes=VMEM_LIMIT),
        cost_estimate=pl.CostEstimate(
            flops=2 * Cout * cin_p * kh * kw * B * mo,
            transcendentals=0,
            bytes_accessed=2 * (cin_p * B * lp + kh * kw * Cout * cin_p
                                + Cout * B * mo)),
    )(xf, wt, s2, z2)

    out = out.reshape(Cout, B, Ho, Wpad)[:, :, :, :Wo]
    return out


# ----------------------------------------------------------------------------
# SpatialGather: softmax(probs over HW) @ feats^T, HW-tiled accumulation
# ----------------------------------------------------------------------------

def _gather_kernel(pmax_ref, probs_ref, feats_ref, o_ref, num_ref, den_ref):
    h = pl.program_id(1)

    @pl.when(h == 0)
    def _():
        num_ref[...] = jnp.zeros_like(num_ref)
        den_ref[...] = jnp.zeros_like(den_ref)

    p = probs_ref[0].astype(jnp.float32)              # (K, hw)
    e = jnp.exp(p - pmax_ref[0])                      # stabilized; pad cols -> 0
    # bf16 MXU operands, f32 accumulation; softmax math stays f32.
    num_ref[...] += jax.lax.dot_general(
        e.astype(jnp.bfloat16), feats_ref[0],
        (((1,), (1,)), ((), ())), preferred_element_type=jnp.float32)
    den_ref[...] += jnp.sum(e, axis=1, keepdims=True)

    @pl.when(h == pl.num_programs(1) - 1)
    def _():
        o_ref[0] = (num_ref[...] / den_ref[...]).astype(o_ref.dtype)


def spatial_gather(feats_bm, probs_bm, *, max_hw_block=4096):
    """feats_bm: (B, C, HW) bf16, probs_bm: (B, K, HW) -> context (B, K, C)."""
    B, C, HW = feats_bm.shape
    K = probs_bm.shape[1]
    pmax = jnp.max(probs_bm.astype(jnp.float32), axis=-1, keepdims=True)
    if HW <= max_hw_block:
        hw_t, hwp = HW, HW
    else:
        hw_t = 2048
        hwp = _round_up(HW, hw_t)
    n_hw = hwp // hw_t
    probs_p = probs_bm.astype(jnp.float32)
    feats_p = feats_bm if feats_bm.dtype == jnp.bfloat16 else feats_bm.astype(jnp.bfloat16)
    if hwp != HW:
        probs_p = jnp.pad(probs_p, ((0, 0), (0, 0), (0, hwp - HW)),
                          constant_values=-jnp.inf)
        feats_p = jnp.pad(feats_p, ((0, 0), (0, 0), (0, hwp - HW)))
    return pl.pallas_call(
        _gather_kernel,
        out_shape=jax.ShapeDtypeStruct((B, K, C), jnp.bfloat16),
        grid=(B, n_hw),
        in_specs=[
            pl.BlockSpec((1, K, 1), lambda b, h: (b, 0, 0)),
            pl.BlockSpec((1, K, hw_t), lambda b, h: (b, 0, h)),
            pl.BlockSpec((1, C, hw_t), lambda b, h: (b, 0, h)),
        ],
        out_specs=pl.BlockSpec((1, K, C), lambda b, h: (b, 0, 0)),
        scratch_shapes=[pltpu.VMEM((K, C), jnp.float32),
                        pltpu.VMEM((K, 1), jnp.float32)],
        compiler_params=pltpu.CompilerParams(
            dimension_semantics=("parallel", "arbitrary"),
            vmem_limit_bytes=VMEM_LIMIT),
    )(pmax, probs_p, feats_p)


# ----------------------------------------------------------------------------
# OCR object attention (lane-dense: HW on the lane axis, softmax over K)
# ----------------------------------------------------------------------------

def _attention_kernel(q_ref, k_ref, v_ref, o_ref, *, scale):
    # bf16 MXU operands, f32 accumulation for sim; f32 softmax.
    sim = jax.lax.dot_general(
        k_ref[0], q_ref[0], (((0,), (0,)), ((), ())),
        preferred_element_type=jnp.float32) * scale                 # (K, hw)
    sim = sim - jnp.max(sim, axis=0, keepdims=True)
    e = jnp.exp(sim)
    attn = e * pl.reciprocal(jnp.sum(e, axis=0, keepdims=True), approx=True)
    o_ref[0] = jnp.dot(v_ref[0], attn.astype(jnp.bfloat16),
                       preferred_element_type=jnp.float32).astype(o_ref.dtype)


def ocr_attention(q_bm, k_bm, v_bm, key_ch, *, max_hw_block=4096):
    """q_bm: (B, Ck, HW), k_bm/v_bm: (B, Ck, K) -> (B, Ck, HW)."""
    B, Ck, HW = q_bm.shape
    K = k_bm.shape[2]
    if HW <= max_hw_block:
        hw_t, hwp = HW, HW
    else:
        hw_t = 2048
        hwp = _round_up(HW, hw_t)
    n_hw = hwp // hw_t
    q_p = q_bm if q_bm.dtype == jnp.bfloat16 else q_bm.astype(jnp.bfloat16)
    if hwp != HW:
        q_p = jnp.pad(q_p, ((0, 0), (0, 0), (0, hwp - HW)))
    out = pl.pallas_call(
        functools.partial(_attention_kernel, scale=float(key_ch) ** -0.5),
        out_shape=jax.ShapeDtypeStruct((B, Ck, hwp), jnp.bfloat16),
        grid=(B, n_hw),
        in_specs=[
            pl.BlockSpec((1, Ck, hw_t), lambda b, h: (b, 0, h)),
            pl.BlockSpec((1, Ck, K), lambda b, h: (b, 0, 0)),
            pl.BlockSpec((1, Ck, K), lambda b, h: (b, 0, 0)),
        ],
        out_specs=pl.BlockSpec((1, Ck, hw_t), lambda b, h: (b, 0, h)),
        compiler_params=pltpu.CompilerParams(
            dimension_semantics=("parallel", "parallel"),
            vmem_limit_bytes=VMEM_LIMIT),
    )(q_p, k_bm.astype(jnp.bfloat16), v_bm.astype(jnp.bfloat16))
    return out[:, :, :HW] if hwp != HW else out


# ----------------------------------------------------------------------------
# Fused bilinear resize (row-tiled: mh-tile @ x @ mw^T), align_corners=False
# ----------------------------------------------------------------------------

def _resize_kernel(x_ref, mh_ref, mw_ref, o_ref):
    x = x_ref[0].astype(jnp.float32)                                 # (h, w)
    t = jnp.dot(mh_ref[...], x, preferred_element_type=jnp.float32)  # (tH, w)
    o_ref[0] = jax.lax.dot_general(
        t, mw_ref[...], (((1,), (1,)), ((), ())),
        preferred_element_type=jnp.float32)                          # (tH, W)


def _bilinear_matrix(n_in, n_out):
    scale = n_in / n_out
    i = np.arange(n_out, dtype=np.float64)
    src = np.clip((i + 0.5) * scale - 0.5, 0.0, n_in - 1)
    lo = np.floor(src).astype(np.int64)
    hi = np.minimum(lo + 1, n_in - 1)
    w_hi = (src - lo).astype(np.float32)
    m = np.zeros((n_out, n_in), dtype=np.float32)
    m[np.arange(n_out), lo] += 1.0 - w_hi
    m[np.arange(n_out), hi] += w_hi
    return jnp.asarray(m)


def scale_as(x, out_hw, *, row_tile=256):
    """x: (C, B, h, w) channel-major -> (C, B, H, W) float32, bilinear."""
    C, B, h, w = x.shape
    H, W = out_hw
    tH = min(row_tile, _round_up(H, 8))
    Hpad = _round_up(H, tH)
    mh = _bilinear_matrix(h, H)     # (H, h)
    if Hpad != H:
        mh = jnp.concatenate([mh, jnp.zeros((Hpad - H, h), jnp.float32)], 0)
    mw = _bilinear_matrix(w, W)     # (W, w)
    planes = x.reshape(C * B, h, w)
    out = pl.pallas_call(
        _resize_kernel,
        out_shape=jax.ShapeDtypeStruct((C * B, Hpad, W), jnp.float32),
        grid=(C * B, Hpad // tH),
        in_specs=[
            pl.BlockSpec((1, h, w), lambda i, t: (i, 0, 0)),
            pl.BlockSpec((tH, h), lambda i, t: (t, 0)),
            pl.BlockSpec((W, w), lambda i, t: (0, 0)),
        ],
        out_specs=pl.BlockSpec((1, tH, W), lambda i, t: (i, t, 0)),
        compiler_params=pltpu.CompilerParams(
            dimension_semantics=("parallel", "parallel"),
            vmem_limit_bytes=VMEM_LIMIT),
    )(planes, mh, mw)
    if Hpad != H:
        out = out[:, :H]
    return out.reshape(C, B, H, W)


# ----------------------------------------------------------------------------
# JAX glue: conv dispatch in channel-major layout, folded BN, im2col fallback
# ----------------------------------------------------------------------------

def _fold_bn(b, bn, cout):
    bias = jnp.zeros((cout,), jnp.float32) if b is None else b.astype(jnp.float32)
    scale = jnp.ones((cout,), jnp.float32)
    if bn is not None:
        s = bn['gamma'] / jnp.sqrt(bn['var'] + 1e-5)
        bias = s * (bias - bn['mean']) + bn['beta']
        scale = scale * s
    return scale, bias


def im2col_cbhw(x, kh, kw, stride, dilation, padding):
    """x: (C, B, H, W) -> (C*kh*kw, B*Ho*Wo) without any transpose."""
    # TODO(synk): replace with a strided direct conv (stride folded into the
    # tap offsets / a per-tile in-kernel im2col) so the kh*kw column blow-up
    # of the stem input never hits HBM; only the backbone stand-in uses this.
    C, B, H, W = x.shape
    xp = jnp.pad(x, ((0, 0), (0, 0), (padding, padding), (padding, padding)))
    Ho = (H + 2 * padding - dilation * (kh - 1) - 1) // stride + 1
    Wo = (W + 2 * padding - dilation * (kw - 1) - 1) // stride + 1
    cols = []
    for i in range(kh):
        for j in range(kw):
            cols.append(xp[:, :,
                           i * dilation:i * dilation + stride * (Ho - 1) + 1:stride,
                           j * dilation:j * dilation + stride * (Wo - 1) + 1:stride])
    col = jnp.stack(cols, axis=1)               # (C, kh*kw, B, Ho, Wo)
    return col.reshape(C * kh * kw, B * Ho * Wo), Ho, Wo


def conv2d(x, w, b, bn, *, stride=1, padding=0, dilation=1, relu=False,
           out_dtype=jnp.bfloat16):
    """Conv + folded eval-mode BN + optional ReLU, in (C, B, H, W) layout."""
    Cout, Cin, kh, kw = w.shape
    scale, bias = _fold_bn(b, bn, Cout)
    C, B, H, W = x.shape
    if kh == 1 and kw == 1 and stride == 1 and padding == 0:
        out = fused_matmul(w.reshape(Cout, Cin), x.reshape(Cin, B * H * W),
                           scale, bias, relu=relu, out_dtype=out_dtype)
        return out.reshape(Cout, B, H, W)
    if stride == 1:
        return conv_direct(x, w, scale, bias, padding=padding,
                           dilation=dilation, relu=relu, out_dtype=out_dtype)
    # Strided conv (tiny backbone-stem stand-in only): im2col + tiled matmul.
    col, Ho, Wo = im2col_cbhw(x, kh, kw, stride, dilation, padding)
    out = fused_matmul(w.reshape(Cout, Cin * kh * kw), col, scale, bias,
                       relu=relu, out_dtype=out_dtype)
    return out.reshape(Cout, B, Ho, Wo)


# ----------------------------------------------------------------------------
# Deterministic parameter construction (synthetic -- no checkpoint)
# ----------------------------------------------------------------------------

def _conv_params(key, cout, cin, kh, kw, bias=True):
    k1, k2 = jax.random.split(key)
    fan_in = cin * kh * kw
    w = jax.random.normal(k1, (cout, cin, kh, kw), jnp.float32) / np.sqrt(fan_in)
    b = 0.01 * jax.random.normal(k2, (cout,), jnp.float32) if bias else None
    return {'w': w, 'b': b}


def _bn_params(key, ch):
    k1, k2, k3, k4 = jax.random.split(key, 4)
    return {'gamma': 1.0 + 0.1 * jax.random.normal(k1, (ch,), jnp.float32),
            'beta': 0.1 * jax.random.normal(k2, (ch,), jnp.float32),
            'mean': 0.1 * jax.random.normal(k3, (ch,), jnp.float32),
            'var': 1.0 + 0.1 * jax.random.uniform(k4, (ch,), jnp.float32)}


def init_params(key, *, in_ch=3, high_level_ch=16, bottleneck_ch=16,
                mid_channels=32, key_channels=16, classes=8):
    keys = iter(jax.random.split(key, 64))
    nk = lambda: next(keys)
    params = {}
    params['backbone'] = {
        'conv1': _conv_params(nk(), high_level_ch, in_ch, 3, 3),
        'bn1': _bn_params(nk(), high_level_ch),
        'conv2': _conv_params(nk(), high_level_ch, high_level_ch, 3, 3),
        'bn2': _bn_params(nk(), high_level_ch),
    }
    aspp = {
        'img_conv': _conv_params(nk(), bottleneck_ch, high_level_ch, 1, 1, bias=False),
        'img_bn': _bn_params(nk(), bottleneck_ch),
        'b0': _conv_params(nk(), bottleneck_ch, high_level_ch, 1, 1, bias=False),
        'bn0': _bn_params(nk(), bottleneck_ch),
    }
    for i in range(1, 4):
        aspp[f'b{i}'] = _conv_params(nk(), bottleneck_ch, high_level_ch, 3, 3, bias=False)
        aspp[f'bn{i}'] = _bn_params(nk(), bottleneck_ch)
    params['aspp'] = aspp
    aspp_out_ch = 5 * bottleneck_ch
    distri = {
        'fp1': _conv_params(nk(), key_channels, mid_channels, 1, 1, bias=False),
        'fp1_bn': _bn_params(nk(), key_channels),
        'fp2': _conv_params(nk(), key_channels, key_channels, 1, 1, bias=False),
        'fp2_bn': _bn_params(nk(), key_channels),
        'fo1': _conv_params(nk(), key_channels, mid_channels, 1, 1, bias=False),
        'fo1_bn': _bn_params(nk(), key_channels),
        'fo2': _conv_params(nk(), key_channels, key_channels, 1, 1, bias=False),
        'fo2_bn': _bn_params(nk(), key_channels),
        'fd': _conv_params(nk(), key_channels, mid_channels, 1, 1, bias=False),
        'fd_bn': _bn_params(nk(), key_channels),
        'fu': _conv_params(nk(), mid_channels, key_channels, 1, 1, bias=False),
        'fu_bn': _bn_params(nk(), mid_channels),
        'out': _conv_params(nk(), mid_channels, 2 * mid_channels, 1, 1, bias=False),
        'out_bn': _bn_params(nk(), mid_channels),
    }
    params['ocr'] = {
        'conv3x3': _conv_params(nk(), mid_channels, aspp_out_ch, 3, 3),
        'conv3x3_bn': _bn_params(nk(), mid_channels),
        'aux1': _conv_params(nk(), aspp_out_ch, aspp_out_ch, 1, 1),
        'aux1_bn': _bn_params(nk(), aspp_out_ch),
        'aux2': _conv_params(nk(), classes, aspp_out_ch, 1, 1),
        'cls': _conv_params(nk(), classes, mid_channels, 1, 1),
        'distri': distri,
    }
    cfg = {'key_channels': key_channels, 'classes': classes,
           'mid_channels': mid_channels, 'aspp_out_ch': aspp_out_ch}
    return params, cfg


# ----------------------------------------------------------------------------
# OCRNetASPP forward
# ----------------------------------------------------------------------------

def ocrnet_aspp_forward(params, cfg, l_img):
    B, _, H, W = l_img.shape
    x = jnp.transpose(l_img, (1, 0, 2, 3))       # NCHW -> channel-major (C,B,H,W)

    # ---- backbone: l_img -> high_level_features ----
    # TODO(synk): get_seg_model (HRNet backbone) is external to the provided
    # module source; a minimal 2-conv stride-4 stem is a deterministic stand-in.
    pb = params['backbone']
    x = conv2d(x, pb['conv1']['w'], pb['conv1']['b'], pb['bn1'],
               stride=2, padding=1, relu=True)
    hlf = conv2d(x, pb['conv2']['w'], pb['conv2']['b'], pb['bn2'],
                 stride=2, padding=1, relu=True)

    # ---- ASPP (output_stride=8 -> dilation rates (12, 24, 36)) ----
    pa = params['aspp']
    Ch, Bh, Hh, Wh = hlf.shape
    # Image-level pool: plain f32 mean in XLA (roofline reduce; per perf review).
    pooled = jnp.mean(hlf.astype(jnp.float32), axis=(2, 3)).reshape(Ch, Bh, 1, 1)
    img_feat = conv2d(pooled, pa['img_conv']['w'], None, pa['img_bn'], relu=True)
    img_feat = jnp.broadcast_to(img_feat, (img_feat.shape[0], Bh, Hh, Wh))
    branches = [img_feat,
                conv2d(hlf, pa['b0']['w'], None, pa['bn0'], relu=True)]
    for i, rate in enumerate((12, 24, 36)):
        branches.append(conv2d(hlf, pa[f'b{i + 1}']['w'], None,
                               pa[f'bn{i + 1}'],
                               padding=rate, dilation=rate, relu=True))
    aspp = jnp.concatenate(branches, axis=0)     # (5*bottleneck, B, Hh, Wh)

    # ---- OCR block ----
    po = params['ocr']
    dd = po['distri']
    key_ch = cfg['key_channels']
    mid = cfg['mid_channels']

    feats = conv2d(aspp, po['conv3x3']['w'], po['conv3x3']['b'],
                   po['conv3x3_bn'], padding=1, relu=True)        # (mid,B,Hh,Wh)
    a1 = conv2d(aspp, po['aux1']['w'], po['aux1']['b'], po['aux1_bn'], relu=True)
    aux_out = conv2d(a1, po['aux2']['w'], po['aux2']['b'], None, relu=False,
                     out_dtype=jnp.float32)                       # f32 logits

    HWf = Hh * Wh
    K = aux_out.shape[0]
    feats_bm = jnp.transpose(feats.reshape(mid, Bh, HWf), (1, 0, 2))
    probs_bm = jnp.transpose(aux_out.reshape(K, Bh, HWf), (1, 0, 2))
    ctx = spatial_gather(feats_bm, probs_bm)                      # (B, K, mid)
    context = jnp.transpose(ctx, (2, 0, 1)).reshape(mid, Bh, K, 1)

    # ObjectAttentionBlock2D (scale=1)
    q = conv2d(feats, dd['fp1']['w'], None, dd['fp1_bn'], relu=True)
    q = conv2d(q, dd['fp2']['w'], None, dd['fp2_bn'], relu=True)  # (key,B,Hh,Wh)

    # f_object stage-1 and f_down share the same RHS (context): fuse into one
    # matmul by concatenating Cout.
    w_kv = jnp.concatenate([dd['fo1']['w'].reshape(key_ch, mid),
                            dd['fd']['w'].reshape(key_ch, mid)], axis=0)
    s1, z1 = _fold_bn(None, dd['fo1_bn'], key_ch)
    s2, z2 = _fold_bn(None, dd['fd_bn'], key_ch)
    kv = fused_matmul(w_kv, context.reshape(mid, Bh * K),
                      jnp.concatenate([s1, s2]), jnp.concatenate([z1, z2]),
                      relu=True)                                  # (2*key, B*K)
    kk = kv[:key_ch].reshape(key_ch, Bh, K, 1)
    v = kv[key_ch:].reshape(key_ch, Bh, K, 1)
    kk = conv2d(kk, dd['fo2']['w'], None, dd['fo2_bn'], relu=True)

    q_bm = jnp.transpose(q.reshape(key_ch, Bh, HWf), (1, 0, 2))
    k_bm = jnp.transpose(kk.reshape(key_ch, Bh, K), (1, 0, 2))
    v_bm = jnp.transpose(v.reshape(key_ch, Bh, K), (1, 0, 2))
    attn = ocr_attention(q_bm, k_bm, v_bm, key_ch)                # (B, key, HW)
    attn = jnp.transpose(attn, (1, 0, 2)).reshape(key_ch, Bh, Hh, Wh)
    attn_up = conv2d(attn, dd['fu']['w'], None, dd['fu_bn'], relu=True)

    # conv_bn_dropout on cat([context, feats]); Dropout2d(0.05) = identity (eval)
    cat = jnp.concatenate([attn_up, feats], axis=0)               # (2*mid,B,Hh,Wh)
    ocr_feats = conv2d(cat, dd['out']['w'], None, dd['out_bn'], relu=True)
    cls_out = conv2d(ocr_feats, po['cls']['w'], po['cls']['b'], None,
                     relu=False, out_dtype=jnp.float32)           # f32 logits

    seg_aux = scale_as(aux_out, (H, W))          # (classes, B, H, W) f32
    seg = scale_as(cls_out, (H, W))
    return {'seg_aux': jnp.transpose(seg_aux, (1, 0, 2, 3)),
            'seg': jnp.transpose(seg, (1, 0, 2, 3))}


if __name__ == "__main__":
    key = jax.random.PRNGKey(0)
    pkey, xkey = jax.random.split(key)
    params, cfg = init_params(pkey, in_ch=3, high_level_ch=16, bottleneck_ch=16,
                              mid_channels=32, key_channels=16, classes=8)
    l_img = jax.random.normal(xkey, (2, 3, 32, 32), jnp.float32)

    outputs = ocrnet_aspp_forward(params, cfg, l_img)
    jax.block_until_ready(outputs)

    assert outputs['seg'].shape == (2, 8, 32, 32), outputs['seg'].shape
    assert outputs['seg_aux'].shape == (2, 8, 32, 32), outputs['seg_aux'].shape
    assert bool(jnp.all(jnp.isfinite(outputs['seg'])))
    assert bool(jnp.all(jnp.isfinite(outputs['seg_aux'])))
    print("KERNEL_OK")
</pallas_src>

<mosaic_0001>
module attributes {stable_mosaic.version = 11 : i64} {
  func.func @_matmul_kernel_k1(%arg0: i32, %arg1: i32, %arg2: memref<16x32xbf16, #tpu.memory_space<vmem>>, %arg3: memref<32x512xbf16, #tpu.memory_space<vmem>>, %arg4: memref<16x1xf32, #tpu.memory_space<vmem>>, %arg5: memref<16x1xf32, #tpu.memory_space<vmem>>, %arg6: memref<16x512xbf16, #tpu.memory_space<vmem>>) attributes {dimension_semantics = [#tpu.dimension_semantics<parallel>, #tpu.dimension_semantics<parallel>], iteration_bounds = array<i64: 1, 1>, scalar_prefetch = 0 : i64, scratch_operands = 0 : i64, tpu.core_type = #tpu.core_type<tc>, window_params = [{transform_indices = @transform_0, window_bounds = array<i64: 16, 32>}, {transform_indices = @transform_1, window_bounds = array<i64: 32, 512>}, {transform_indices = @transform_2, window_bounds = array<i64: 16, 1>}, {transform_indices = @transform_3, window_bounds = array<i64: 16, 1>}, {transform_indices = @transform_4, window_bounds = array<i64: 16, 512>}]} {
    %c0 = arith.constant 0 : index
    %c0_0 = arith.constant 0 : index
    %0 = vector.load %arg2[%c0, %c0_0] : memref<16x32xbf16, #tpu.memory_space<vmem>>, vector<16x32xbf16>
    %c0_1 = arith.constant 0 : index
    %c0_2 = arith.constant 0 : index
    %1 = vector.load %arg3[%c0_1, %c0_2] : memref<32x512xbf16, #tpu.memory_space<vmem>>, vector<32x512xbf16>
    %cst = arith.constant dense<0.000000e+00> : vector<16x512xf32>
    %2 = tpu.matmul %0, %1, %cst {dimension_numbers = #tpu.dot_dimension_numbers<[1], [0], [0], [1], [0, 0, 1, 1], [], []>} : vector<16x32xbf16>, vector<32x512xbf16>, vector<16x512xf32> -> vector<16x512xf32>
    %c0_3 = arith.constant 0 : index
    %c0_4 = arith.constant 0 : index
    %3 = vector.load %arg4[%c0_3, %c0_4] : memref<16x1xf32, #tpu.memory_space<vmem>>, vector<16x1xf32>
    %4 = vector.broadcast %3 : vector<16x1xf32> to vector<16x512xf32>
    %5 = arith.mulf %2, %4 : vector<16x512xf32>
    %c0_5 = arith.constant 0 : index
    %c0_6 = arith.constant 0 : index
    %6 = vector.load %arg5[%c0_5, %c0_6] : memref<16x1xf32, #tpu.memory_space<vmem>>, vector<16x1xf32>
    %7 = vector.broadcast %6 : vector<16x1xf32> to vector<16x512xf32>
    %8 = arith.addf %5, %7 : vector<16x512xf32>
    %cst_7 = arith.constant 0.000000e+00 : f32
    %9 = vector.broadcast %cst_7 : f32 to vector<16x512xf32>
    %10 = arith.maximumf %8, %9 : vector<16x512xf32>
    %11 = arith.truncf %10 : vector<16x512xf32> to vector<16x512xbf16>
    %c0_8 = arith.constant 0 : index
    %c0_9 = arith.constant 0 : index
    %12 = vector.load %arg6[%c0_8, %c0_9] : memref<16x512xbf16, #tpu.memory_space<vmem>>, vector<16x512xbf16>
    tpu.vector_store %arg6[%c0_8, %c0_9], %11 {strides = array<i32>} : memref<16x512xbf16, #tpu.memory_space<vmem>>, vector<16x512xbf16>,
    return
  }
  func.func @transform_0(%arg0: i32, %arg1: i32) -> (i32, i32) {
    %c0_i32 = arith.constant 0 : i32
    %c0_i32_0 = arith.constant 0 : i32
    return %arg1, %c0_i32 : i32, i32
  }
  func.func @transform_1(%arg0: i32, %arg1: i32) -> (i32, i32) {
    %c0_i32 = arith.constant 0 : i32
    %c0_i32_0 = arith.constant 0 : i32
    return %c0_i32, %arg0 : i32, i32
  }
  func.func @transform_2(%arg0: i32, %arg1: i32) -> (i32, i32) {
    %c0_i32 = arith.constant 0 : i32
    %c0_i32_0 = arith.constant 0 : i32
    return %arg1, %c0_i32 : i32, i32
  }
  func.func @transform_3(%arg0: i32, %arg1: i32) -> (i32, i32) {
    %c0_i32 = arith.constant 0 : i32
    %c0_i32_0 = arith.constant 0 : i32
    return %arg1, %c0_i32 : i32, i32
  }
  func.func @transform_4(%arg0: i32, %arg1: i32) -> (i32, i32) {
    %c0_i32 = arith.constant 0 : i32
    return %arg1, %arg0 : i32, i32
  }
}

</mosaic_0001>

<llo_original>
// kernel: tpu_custom_call.1
$region0: #{tpu_custom_call.1}
  #allocation0 [shape = 'u32[]', space=smem, size = 0x4, offset = 0x4, fixed_abs, tag = 'smem constant byte address 0x4 - core index']
  #allocation1 [shape = 'u32[144,128]{1,0:T(1,128)}', space=vmem, size = 0x12000, scoped, tag = 'internal scratch']
  %s0 = inlined_call_operand.vmem [shape: bf16[16,32], index: 0, kind: input, shape index: {}]
  %s1 = inlined_call_operand.hbm [shape: bf16[32,512], index: 1, kind: input, shape index: {}]
  %s2 = inlined_call_operand.vmem [shape: f32[16,1], index: 2, kind: input, shape index: {}]
  %s3 = inlined_call_operand.vmem [shape: f32[16,1], index: 3, kind: input, shape index: {}]
  %s4 = inlined_call_operand.hbm [shape: bf16[16,512], index: 4, kind: output, shape index: {}]
  %s5 = sld [smem:[#allocation0]]
  $region30: #{tpu_custom_call.1} parent=0
    _
  %s7 = ssub.s32 1, %s5
  %s8 = scalar_select 0, %s7, %s5
  $region1: #{tpu_custom_call.1} parent=0
    #allocation2 [shape = 'u8[32768]{0}', space=vmem, size = 0x8000, scoped, tag = 'input window, operand 1, single buffered']
    #allocation3 [shape = 's32[1]{0}', space=sflag, size = 0x4, scoped, tag = 'scoped memory for tpu_custom_call.1']
    #allocation4 [shape = 's32[1]{0}', space=sflag, size = 0x4, scoped, tag = 'scoped memory for tpu_custom_call.1']
    #allocation5 [shape = 'u8[16384]{0}', space=vmem, size = 0x4000, scoped, tag = 'output window, operand 0, single buffered']
    %9 = vsyncpa [#allocation3], 0
    %10 = vsyncpa [#allocation4], 0
    // Predicated region
    $region2: #{tpu_custom_call.1} parent=1 // pred_check
      _
    $region3: #{tpu_custom_call.1} parent=1 // pred_check_branch
      %12 = sbr.rel (0) target = $region5
    $region4: #{tpu_custom_call.1} parent=1 // pred_region
      _
    $region5: #{tpu_custom_call.1} parent=1 // pred_fallthru
      _
    // Predicated region
    $region6: #{tpu_custom_call.1} parent=1 // pred_check
      _
    $region7: #{tpu_custom_call.1} parent=1 // pred_check_branch
      %14 = sbr.rel (0) target = $region9
    $region8: #{tpu_custom_call.1} parent=1 // pred_region
      %s16 = ssub.s32 1024, 1024
      %17 = vsyncadd [#allocation3], %s16
      %s18 = sshll.u32 [#allocation2], 4
      %s19 = int_to_ptr.vmem [resolvable:$true] %s18
      %24 = dma.hbm_to_vmem [thread:$0]  %s1, 1024, %s19, [#allocation3], 256, 256, 16
    $region9: #{tpu_custom_call.1} parent=1 // pred_fallthru
      _
    // Predicated region
    $region10: #{tpu_custom_call.1} parent=1 // pred_check
      _
    $region11: #{tpu_custom_call.1} parent=1 // pred_check_branch
      %26 = sbr.rel (0) target = $region13
    $region12: #{tpu_custom_call.1} parent=1 // pred_region
      _
    $region13: #{tpu_custom_call.1} parent=1 // pred_fallthru
      _
    // Predicated region
    $region14: #{tpu_custom_call.1} parent=1 // pred_check
      _
    $region15: #{tpu_custom_call.1} parent=1 // pred_check_branch
      %28 = sbr.rel (0) target = $region17
    $region16: #{tpu_custom_call.1} parent=1 // pred_region
      _
    $region17: #{tpu_custom_call.1} parent=1 // pred_fallthru
      _
    // Predicated region
    $region18: #{tpu_custom_call.1} parent=1 // pred_check
      _
    $region19: #{tpu_custom_call.1} parent=1 // pred_check_branch
      %30 = sbr.rel (0) target = $region21
    $region20: #{tpu_custom_call.1} parent=1 // pred_region
      %31 = dma.done [#allocation3], 1024
    $region21: #{tpu_custom_call.1} parent=1 // pred_fallthru
      _
    %v33 = vld [vmem:[%s0] sm:$0xf]
    %v34 = vld [vmem:[%s0 + $0x4] sm:$0xf]
    %v35 = vld [vmem:[#allocation2] sm:$0xff]
    %v36 = vld [vmem:[#allocation2 + $0x8] sm:$0xff]
    %v37 = vld [vmem:[#allocation2 + $0x10] sm:$0xff]
    %v38 = vld [vmem:[#allocation2 + $0x18] sm:$0xff]
    %v39 = vld [vmem:[#allocation2 + $0x20] sm:$0xff]
    %v40 = vld [vmem:[#allocation2 + $0x28] sm:$0xff]
    %v41 = vld [vmem:[#allocation2 + $0x30] sm:$0xff]
    %v42 = vld [vmem:[#allocation2 + $0x38] sm:$0xff]
    %v45 = vunpack.c.l.b16 %v33
    %v46 = vunpack.c.l.b16 %v34
    %v47 = vpack.c.b16 %v46, %v45
    %v56 = vunpack.c.l.b16 %v35
    %v57 = vunpack.c.h.b16 %v35
    %v58 = vunpack.c.l.b16 %v36
    %v59 = vunpack.c.h.b16 %v36
    %v60 = vunpack.c.l.b16 %v37
    %v61 = vunpack.c.h.b16 %v37
    %v62 = vunpack.c.l.b16 %v38
    %v63 = vunpack.c.h.b16 %v38
    %v64 = vunpack.c.l.b16 %v39
    %v65 = vunpack.c.h.b16 %v39
    %v66 = vunpack.c.l.b16 %v40
    %v67 = vunpack.c.h.b16 %v40
    %v68 = vunpack.c.l.b16 %v41
    %v69 = vunpack.c.h.b16 %v41
    %v70 = vunpack.c.l.b16 %v42
    %v71 = vunpack.c.h.b16 %v42
    %v72 = vpack.c.b16 %v60, %v56
    %v73 = vpack.c.b16 %v61, %v57
    %v74 = vpack.c.b16 %v62, %v58
    %v75 = vpack.c.b16 %v63, %v59
    %v76 = vpack.c.b16 %v68, %v64
    %v77 = vpack.c.b16 %v69, %v65
    %v78 = vpack.c.b16 %v70, %v66
    %v79 = vpack.c.b16 %v71, %v67
    %vm88 = vcmask 261120
    %v90 = vsel %vm88, %v47, 0
    %92 = vmatprep.subr.bf16.mxu0 %v73
    %93 = vmatpush1.bf16.msra.mxu0 %v72
    %94 = vmatprep.subr.bf16.mxu0 %v77
    %95 = vmatpush1.bf16.msra.mxu0 %v76
    %96 = vmatprep.subr.bf16.mxu0 0
    %97 = vmatpush1.bf16.msra.mxu0 0
    %98 = vmatprep.subr.bf16.mxu0 0
    %99 = vmatpush1.bf16.msra.mxu0 0
    %100 = vmatprep.subr.bf16.mxu0 0
    %101 = vmatpush1.bf16.msra.mxu0 0
    %102 = vmatprep.subr.bf16.mxu0 0
    %103 = vmatpush1.bf16.msra.mxu0 0
    %104 = vmatprep.subr.bf16.mxu0 0
    %105 = vmatpush1.bf16.msra.mxu0 0
    %106 = vmatprep.subr.bf16.mxu0 0
    %107 = vmatpush1.bf16.msra.mxu0 0
    %108 = vmatprep.subr.bf16.mxu0 0
    %109 = vmatpush1.bf16.msra.mxu0 0
    %110 = vmatprep.subr.bf16.mxu0 0
    %111 = vmatpush1.bf16.msra.mxu0 0
    %112 = vmatprep.subr.bf16.mxu0 0
    %113 = vmatpush1.bf16.msra.mxu0 0
    %114 = vmatprep.subr.bf16.mxu0 0
    %115 = vmatpush1.bf16.msra.mxu0 0
    %116 = vmatprep.subr.bf16.mxu0 0
    %117 = vmatpush1.bf16.msra.mxu0 0
    %118 = vmatprep.subr.bf16.mxu0 0
    %119 = vmatpush1.bf16.msra.mxu0 0
    %120 = vmatprep.subr.bf16.mxu0 0
    %121 = vmatpush1.bf16.msra.mxu0 0
    %122 = vmatprep.subr.bf16.mxu0 0
    %123 = vmatpush1.bf16.msra.mxu0 0
    %124 = vmatprep.mubr.bf16.mxu0 0
    %125 = vmatmul.mubr.bf16.gmra.mrb[0].mxu0 %v90
    %v126 = vpop.f32.mrb[0].mxu0
    %v127 = vadd.f32 0.0, %v126
    %v128 = vpop.f32.mrb[0].mxu0
    %v129 = vadd.f32 0.0, %v128
    %v130 = vpop.f32.mrb[0].mxu0
    %v131 = vadd.f32 0.0, %v130
    %v132 = vpop.f32.mrb[0].mxu0
    %v133 = vadd.f32 0.0, %v132
    %134 = vdwg.mxu0
    %135 = vmatprep.subr.bf16.mxu0 %v75
    %136 = vmatpush1.bf16.msra.mxu0 %v74
    %137 = vmatprep.subr.bf16.mxu0 %v79
    %138 = vmatpush1.bf16.msra.mxu0 %v78
    %139 = vmatprep.subr.bf16.mxu0 0
    %140 = vmatpush1.bf16.msra.mxu0 0
    %141 = vmatprep.subr.bf16.mxu0 0
    %142 = vmatpush1.bf16.msra.mxu0 0
    %143 = vmatprep.subr.bf16.mxu0 0
    %144 = vmatpush1.bf16.msra.mxu0 0
    %145 = vmatprep.subr.bf16.mxu0 0
    %146 = vmatpush1.bf16.msra.mxu0 0
    %147 = vmatprep.subr.bf16.mxu0 0
    %148 = vmatpush1.bf16.msra.mxu0 0
    %149 = vmatprep.subr.bf16.mxu0 0
    %150 = vmatpush1.bf16.msra.mxu0 0
    %151 = vmatprep.subr.bf16.mxu0 0
    %152 = vmatpush1.bf16.msra.mxu0 0
    %153 = vmatprep.subr.bf16.mxu0 0
    %154 = vmatpush1.bf16.msra.mxu0 0
    %155 = vmatprep.subr.bf16.mxu0 0
    %156 = vmatpush1.bf16.msra.mxu0 0
    %157 = vmatprep.subr.bf16.mxu0 0
    %158 = vmatpush1.bf16.msra.mxu0 0
    %159 = vmatprep.subr.bf16.mxu0 0
    %160 = vmatpush1.bf16.msra.mxu0 0
    %161 = vmatprep.subr.bf16.mxu0 0
    %162 = vmatpush1.bf16.msra.mxu0 0
    %163 = vmatprep.subr.bf16.mxu0 0
    %164 = vmatpush1.bf16.msra.mxu0 0
    %165 = vmatprep.subr.bf16.mxu0 0
    %166 = vmatpush1.bf16.msra.mxu0 0
    %167 = vmatprep.mubr.bf16.mxu0 0
    %168 = vmatmul.mubr.bf16.gmra.mrb[0].mxu0 %v90
    %v169 = vpop.f32.mrb[0].mxu0
    %v170 = vadd.f32 0.0, %v169
    %v171 = vpop.f32.mrb[0].mxu0
    %v172 = vadd.f32 0.0, %v171
    %v173 = vpop.f32.mrb[0].mxu0
    %v174 = vadd.f32 0.0, %v173
    %v175 = vpop.f32.mrb[0].mxu0
    %v176 = vadd.f32 0.0, %v175
    %177 = vdwg.mxu0
    %v178 = vld [vmem:[%s2] sm:$0xff]
    %v179 = vld [vmem:[%s2 + $0x8] sm:$0xff]
    %181 = vset.pattern.permute.xlu0 0
    %182 = vperm.xlu0 %181, %v178
    %v183 = vpop.permute.xlu0 %182
    %186 = vset.pattern.permute.xlu0 0
    %187 = vperm.xlu0 %186, %v179
    %v188 = vpop.permute.xlu0 %187
    %v190 = vmul.f32 %v127, %v183
    %v191 = vmul.f32 %v129, %v183
    %v192 = vmul.f32 %v170, %v183
    %v193 = vmul.f32 %v172, %v183
    %v194 = vmul.f32 %v131, %v188
    %v195 = vmul.f32 %v133, %v188
    %v196 = vmul.f32 %v174, %v188
    %v197 = vmul.f32 %v176, %v188
    %v198 = vld [vmem:[%s3] sm:$0xff]
    %v199 = vld [vmem:[%s3 + $0x8] sm:$0xff]
    %201 = vset.pattern.permute.xlu0 0
    %202 = vperm.xlu0 %201, %v198
    %v203 = vpop.permute.xlu0 %202
    %206 = vset.pattern.permute.xlu0 0
    %207 = vperm.xlu0 %206, %v199
    %v208 = vpop.permute.xlu0 %207
    %v210 = vadd.f32 %v190, %v203
    %v211 = vadd.f32 %v191, %v203
    %v212 = vadd.f32 %v192, %v203
    %v213 = vadd.f32 %v193, %v203
    %v214 = vadd.f32 %v194, %v208
    %v215 = vadd.f32 %v195, %v208
    %v216 = vadd.f32 %v196, %v208
    %v217 = vadd.f32 %v197, %v208
    %v218 = vmax.f32 %v210, 0.0
    %v219 = vmax.f32 %v211, 0.0
    %v220 = vmax.f32 %v212, 0.0
    %v221 = vmax.f32 %v213, 0.0
    %v222 = vmax.f32 %v214, 0.0
    %v223 = vmax.f32 %v215, 0.0
    %v224 = vmax.f32 %v216, 0.0
    %v225 = vmax.f32 %v217, 0.0
    %v226 = vpack.c.bf16 %v222, %v218
    %v227 = vpack.c.bf16 %v223, %v219
    %v228 = vpack.c.bf16 %v224, %v220
    %v229 = vpack.c.bf16 %v225, %v221
    %v234 = vunpack.c.l.b16 %v226
    %v235 = vunpack.c.l.b16 %v227
    %v236 = vunpack.c.l.b16 %v228
    %v237 = vunpack.c.l.b16 %v229
    %v238 = vunpack.c.h.b16 %v226
    %v239 = vunpack.c.h.b16 %v227
    %v240 = vunpack.c.h.b16 %v228
    %v241 = vunpack.c.h.b16 %v229
    %v242 = vpack.c.b16 %v235, %v234
    %v243 = vpack.c.b16 %v237, %v236
    %v244 = vpack.c.b16 %v239, %v238
    %v245 = vpack.c.b16 %v241, %v240
    %250 = vst [vmem:[#allocation5] sm:$0xff] %v242
    %251 = vst [vmem:[#allocation5 + $0x8] sm:$0xff] %v243
    %252 = vst [vmem:[#allocation5 + $0x10] sm:$0xff] %v244
    %253 = vst [vmem:[#allocation5 + $0x18] sm:$0xff] %v245
    // Predicated region
    $region22: #{tpu_custom_call.1} parent=1 // pred_check
      _
    $region23: #{tpu_custom_call.1} parent=1 // pred_check_branch
      %255 = sbr.rel (0) target = $region25
    $region24: #{tpu_custom_call.1} parent=1 // pred_region
      %s257 = ssub.s32 512, 512
      %258 = vsyncadd [#allocation4], %s257
      %s259 = sshll.u32 [#allocation5], 4
      %s260 = int_to_ptr.vmem [resolvable:$true] %s259
      %265 = dma.vmem_to_hbm [thread:$0]  %s260, 512, %s4, [#allocation4], 256, 256, 16
    $region25: #{tpu_custom_call.1} parent=1 // pred_fallthru
      _
    // Predicated region
    $region26: #{tpu_custom_call.1} parent=1 // pred_check
      _
    $region27: #{tpu_custom_call.1} parent=1 // pred_check_branch
      %267 = sbr.rel (0) target = $region29
    $region28: #{tpu_custom_call.1} parent=1 // pred_region
      %268 = dma.done [#allocation4], 512
    $region29: #{tpu_custom_call.1} parent=1 // pred_fallthru
      _
    %269 = vsyncpa [#allocation3], 1
    %270 = vsyncpa [#allocation4], 1

</llo_original>
